<compile_context>
chip_gen: v7x
topology: tpu7x:2x2x1
jax: 0.10.0
libtpu: 0.0.40
codegen_flags: <defaults>
</compile_context>

<pallas_src>
import numpy as np
import jax
import jax.numpy as jnp
from jax.experimental import pallas as pl
from jax.experimental.pallas import tpu as pltpu


def _adaptive_pool_factors(in_size: int, out_size: int):
    """0/1 indicator (out, in) + window sizes (out,) with exact PyTorch
    adaptive window boundaries:
      start = floor(o * in / out), end = ceil((o + 1) * in / out)."""
    ind = np.zeros((out_size, in_size), dtype=np.float32)
    win = np.zeros((out_size,), dtype=np.float32)
    for o in range(out_size):
        start = (o * in_size) // out_size
        end = -((-(o + 1) * in_size) // out_size)      # ceil div
        ind[o, start:end] = 1.0
        win[o] = float(end - start)
    return ind, win


def _vmem_capacity_bytes() -> int:
    try:
        return int(pltpu.get_tpu_info().vmem_capacity_bytes)
    except Exception:
        return 64 * 1024 * 1024    # conservative: v7x per-TensorCore VMEM


def _plan_tiling(B, C, HW, OHW, x_itemsize, mask_itemsize, mask_per_channel):
    """Pick the channel tile TC and an explicit scoped-VMEM limit.

    Accounts for the full per-step footprint: double-buffered x / out blocks,
    the mask block (double-buffered per-channel only when mask has C channels),
    and the pooling-matrix buffers (counted twice, conservatively, in case the
    single-buffer request is not honored)."""
    capacity = _vmem_capacity_bytes()
    # ~40% of physical VMEM: ~25 MiB on v7x (64 MiB/TC), ~51 MiB on v5e/v6e.
    total_budget = (capacity * 2) // 5

    fixed = 2 * HW * OHW * x_itemsize           # K pooling indicator buffers
    fixed += 2 * OHW * 4                        # D reciprocal-area vector (f32)
    if not mask_per_channel:
        fixed += 2 * HW * mask_itemsize         # (1, 1, HW) mask block

    per_channel = 2 * HW * x_itemsize           # x block, double buffered
    per_channel += 2 * OHW * x_itemsize         # out block, double buffered
    if mask_per_channel:
        per_channel += 2 * HW * mask_itemsize   # (1, TC, HW) mask block

    avail = max(total_budget - fixed, per_channel)
    tc = max(1, avail // per_channel)

    # Dtype-native sublane multiple: 8 for f32, 16 for bf16, 32 for int8/fp8.
    mult = 8 * max(1, 4 // x_itemsize)

    # Keep at least ~4 grid steps (>= 2 per TensorCore on v7x) when possible.
    min_steps = 4
    if B < min_steps and C > mult:
        needed_tiles = -(-min_steps // B)
        tc = min(tc, max(mult, -(-C // needed_tiles)))

    tc = max(mult, (tc // mult) * mult)
    tc = C if tc >= C else tc

    footprint = fixed + tc * per_channel
    vmem_limit = min(capacity,
                     max(footprint + max(footprint // 4, 4 << 20), 16 << 20))
    return int(tc), int(vmem_limit)


def _masked_pool_kernel(x_ref, m_ref, k_ref, d_ref, o_ref):
    # x_ref : (1, TC, HW)          native dtype
    # m_ref : (1, 1 or TC, HW)     native dtype (channel broadcast in-kernel)
    # k_ref : (HW, OHW)            0/1 window indicator, native dtype (exact)
    # d_ref : (1, OHW)             f32 reciprocal window areas
    # o_ref : (1, TC, OHW)
    xm = x_ref[0] * m_ref[0]                                    # (TC, HW)
    pooled = jnp.dot(xm, k_ref[...],
                     preferred_element_type=jnp.float32)        # (TC, OHW) f32
    o_ref[0] = (pooled * d_ref[...]).astype(o_ref.dtype)


def masked_adaptive_avg_pool2d(x, mask, output_size):
    """x: (B, C, H, W); mask broadcastable to x (typically (B, 1, H, W))."""
    B, C, H, W = x.shape
    if isinstance(output_size, (tuple, list)):
        OH, OW = int(output_size[0]), int(output_size[1])
    else:
        OH = OW = int(output_size)
    HW, OHW = H * W, OH * OW

    # Exact PyTorch adaptive windows, factored into indicator (K) x scale (D).
    ih, wh = _adaptive_pool_factors(H, OH)
    iw, ww = _adaptive_pool_factors(W, OW)
    kt = jnp.asarray(np.kron(ih, iw).T, dtype=x.dtype)          # (HW, OHW) 0/1
    d = jnp.asarray((1.0 / np.outer(wh, ww).reshape(1, -1)).astype(np.float32))

    # Keep the mask's native channel dim (1 or C): broadcast over C in-kernel.
    # TODO(synk): a bf16 mask stream would halve mask HBM traffic when it
    # arrives as (B, C, H, W); kept at x.dtype to stay exact for non-binary masks.
    mask = jnp.asarray(mask)
    if mask.ndim != 4:
        mask = jnp.broadcast_to(mask, x.shape)
    MC = mask.shape[1]
    mask2 = (jnp.broadcast_to(mask, (B, MC, H, W))
             .reshape(B, MC, HW).astype(x.dtype))

    # Lane-dense view of x (free reshape of a contiguous array).
    x2 = x.reshape(B, C, HW)

    itemsize = jnp.dtype(x.dtype).itemsize
    TC, vmem_limit = _plan_tiling(B, C, HW, OHW, itemsize, itemsize, MC != 1)
    n_ct = pl.cdiv(C, TC)

    MTC = 1 if MC == 1 else TC
    mask_index_map = ((lambda b, c: (b, 0, 0)) if MC == 1
                      else (lambda b, c: (b, c, 0)))

    x_spec = pl.BlockSpec((1, TC, HW), lambda b, c: (b, c, 0))
    m_spec = pl.BlockSpec((1, MTC, HW), mask_index_map)
    d_spec = pl.BlockSpec((1, OHW), lambda b, c: (0, 0))
    out_spec = pl.BlockSpec((1, TC, OHW), lambda b, c: (b, c, 0))

    cost = pl.CostEstimate(
        flops=2 * B * C * HW * OHW + B * C * HW,
        transcendentals=0,
        bytes_accessed=int(x2.size * itemsize + mask2.size * itemsize
                           + kt.size * itemsize + d.size * 4
                           + B * C * OHW * itemsize),
    )
    params = pltpu.CompilerParams(
        dimension_semantics=("parallel", "parallel"),
        vmem_limit_bytes=vmem_limit,
    )

    def run(k_pipeline_mode):
        if k_pipeline_mode is None:
            k_spec = pl.BlockSpec((HW, OHW), lambda b, c: (0, 0))
        else:
            k_spec = pl.BlockSpec((HW, OHW), lambda b, c: (0, 0),
                                  pipeline_mode=k_pipeline_mode)
        return pl.pallas_call(
            _masked_pool_kernel,
            out_shape=jax.ShapeDtypeStruct((B, C, OHW), x.dtype),
            grid_spec=pltpu.PrefetchScalarGridSpec(
                num_scalar_prefetch=0,
                grid=(B, n_ct),
                in_specs=[x_spec, m_spec, k_spec, d_spec],
                out_specs=out_spec,
            ),
            compiler_params=params,
            cost_estimate=cost,
        )(x2, mask2, kt, d)

    try:
        # K's block index is grid-invariant -> single-buffer it (saves VMEM,
        # which converts directly into a larger channel tile on v7x).
        out2 = run(pl.Buffered(1))
    except Exception:
        # Fallback for Pallas versions that reject single-buffering.
        out2 = run(None)

    return out2.reshape(B, C, OH, OW)


if __name__ == "__main__":
    key = jax.random.PRNGKey(0)

    def ref_adaptive_avg_pool2d(x_np, out_size):
        """Pure-numpy adaptive_avg_pool2d with PyTorch window boundaries."""
        B, C, H, W = x_np.shape
        out = np.zeros((B, C, out_size, out_size), dtype=np.float64)
        for oh in range(out_size):
            hs = (oh * H) // out_size
            he = -((-(oh + 1) * H) // out_size)
            for ow in range(out_size):
                ws = (ow * W) // out_size
                we = -((-(ow + 1) * W) // out_size)
                out[:, :, oh, ow] = x_np[:, :, hs:he, ws:we].mean(axis=(2, 3))
        return out

    # --- Case 1: divisible windows (16x16 -> 4x4), mask (B, 1, H, W). ---
    B, C, H, W, OS = 2, 4, 16, 16, 4
    kx, km, key = jax.random.split(key, 3)
    x = jax.random.normal(kx, (B, C, H, W), dtype=jnp.float32)
    mask = (jax.random.uniform(km, (B, 1, H, W)) > 0.5).astype(jnp.float32)

    out = jax.block_until_ready(masked_adaptive_avg_pool2d(x, mask, OS))
    masked = np.asarray(x) * np.asarray(mask)
    ref_simple = masked.reshape(B, C, OS, H // OS, OS, W // OS).mean(axis=(3, 5))
    np.testing.assert_allclose(np.asarray(out), ref_simple, rtol=1e-5, atol=1e-5)
    np.testing.assert_allclose(np.asarray(out),
                               ref_adaptive_avg_pool2d(masked, OS),
                               rtol=1e-5, atol=1e-5)
    assert out.shape == (B, C, OS, OS)

    # --- Case 2: non-divisible adaptive windows (10x10 -> 3x3). ---
    B, C, H, W, OS = 2, 4, 10, 10, 3
    kx, km, key = jax.random.split(key, 3)
    x = jax.random.normal(kx, (B, C, H, W), dtype=jnp.float32)
    mask = (jax.random.uniform(km, (B, 1, H, W)) > 0.5).astype(jnp.float32)

    out = jax.block_until_ready(masked_adaptive_avg_pool2d(x, mask, OS))
    ref_uneven = ref_adaptive_avg_pool2d(np.asarray(x) * np.asarray(mask), OS)
    np.testing.assert_allclose(np.asarray(out), ref_uneven, rtol=1e-5, atol=1e-5)
    assert out.shape == (B, C, OS, OS)

    print("KERNEL_OK")
</pallas_src>

<mosaic_0001>
module attributes {stable_mosaic.version = 11 : i64} {
  func.func @_masked_pool_kernel(%arg0: i32, %arg1: i32, %arg2: memref<1x4x256xf32, #tpu.memory_space<vmem>>, %arg3: memref<1x1x256xf32, #tpu.memory_space<vmem>>, %arg4: memref<256x16xf32, #tpu.memory_space<vmem>>, %arg5: memref<1x16xf32, #tpu.memory_space<vmem>>, %arg6: memref<1x4x16xf32, #tpu.memory_space<vmem>>) attributes {dimension_semantics = [#tpu.dimension_semantics<parallel>, #tpu.dimension_semantics<parallel>], iteration_bounds = array<i64: 2, 1>, scalar_prefetch = 0 : i64, scratch_operands = 0 : i64, tpu.core_type = #tpu.core_type<tc>, window_params = [{transform_indices = @transform_0, window_bounds = array<i64: 1, 4, 256>}, {transform_indices = @transform_1, window_bounds = array<i64: 1, 1, 256>}, {pipeline_mode = #tpu.pipeline_mode<synchronous>, transform_indices = @transform_2, window_bounds = array<i64: 256, 16>}, {pipeline_mode = #tpu.pipeline_mode<synchronous>, transform_indices = @transform_3, window_bounds = array<i64: 1, 16>}, {transform_indices = @transform_4, window_bounds = array<i64: 1, 4, 16>}]} {
    %c0 = arith.constant 0 : index
    %c0_0 = arith.constant 0 : index
    %c0_1 = arith.constant 0 : index
    %0 = vector.load %arg2[%c0, %c0_0, %c0_1] : memref<1x4x256xf32, #tpu.memory_space<vmem>>, vector<1x4x256xf32>
    %1 = vector.shape_cast %0 : vector<1x4x256xf32> to vector<4x256xf32>
    %c0_2 = arith.constant 0 : index
    %c0_3 = arith.constant 0 : index
    %c0_4 = arith.constant 0 : index
    %2 = vector.load %arg3[%c0_2, %c0_3, %c0_4] : memref<1x1x256xf32, #tpu.memory_space<vmem>>, vector<1x1x256xf32>
    %3 = vector.shape_cast %2 : vector<1x1x256xf32> to vector<1x256xf32>
    %4 = vector.broadcast %3 : vector<1x256xf32> to vector<4x256xf32>
    %5 = arith.mulf %1, %4 : vector<4x256xf32>
    %c0_5 = arith.constant 0 : index
    %c0_6 = arith.constant 0 : index
    %6 = vector.load %arg4[%c0_5, %c0_6] : memref<256x16xf32, #tpu.memory_space<vmem>>, vector<256x16xf32>
    %cst = arith.constant dense<0.000000e+00> : vector<4x16xf32>
    %7 = tpu.matmul %5, %6, %cst {dimension_numbers = #tpu.dot_dimension_numbers<[1], [0], [0], [1], [0, 0, 1, 1], [], []>} : vector<4x256xf32>, vector<256x16xf32>, vector<4x16xf32> -> vector<4x16xf32>
    %c0_7 = arith.constant 0 : index
    %c0_8 = arith.constant 0 : index
    %8 = vector.load %arg5[%c0_7, %c0_8] : memref<1x16xf32, #tpu.memory_space<vmem>>, vector<1x16xf32>
    %9 = vector.broadcast %8 : vector<1x16xf32> to vector<4x16xf32>
    %10 = arith.mulf %7, %9 : vector<4x16xf32>
    %c0_9 = arith.constant 0 : index
    %c0_10 = arith.constant 0 : index
    %c0_11 = arith.constant 0 : index
    %11 = vector.load %arg6[%c0_9, %c0_10, %c0_11] : memref<1x4x16xf32, #tpu.memory_space<vmem>>, vector<1x4x16xf32>
    %12 = vector.shape_cast %11 : vector<1x4x16xf32> to vector<4x16xf32>
    %13 = vector.shape_cast %10 : vector<4x16xf32> to vector<1x4x16xf32>
    tpu.vector_store %arg6[%c0_9, %c0_10, %c0_11], %13 {strides = array<i32>} : memref<1x4x16xf32, #tpu.memory_space<vmem>>, vector<1x4x16xf32>,
    return
  }
  func.func @transform_0(%arg0: i32, %arg1: i32) -> (i32, i32, i32) {
    %c0_i32 = arith.constant 0 : i32
    %c0_i32_0 = arith.constant 0 : i32
    return %arg0, %arg1, %c0_i32 : i32, i32, i32
  }
  func.func @transform_1(%arg0: i32, %arg1: i32) -> (i32, i32, i32) {
    %c0_i32 = arith.constant 0 : i32
    %c0_i32_0 = arith.constant 0 : i32
    %c0_i32_1 = arith.constant 0 : i32
    return %arg0, %c0_i32, %c0_i32_0 : i32, i32, i32
  }
  func.func @transform_2(%arg0: i32, %arg1: i32) -> (i32, i32) {
    %c0_i32 = arith.constant 0 : i32
    %c0_i32_0 = arith.constant 0 : i32
    %c0_i32_1 = arith.constant 0 : i32
    return %c0_i32, %c0_i32_0 : i32, i32
  }
  func.func @transform_3(%arg0: i32, %arg1: i32) -> (i32, i32) {
    %c0_i32 = arith.constant 0 : i32
    %c0_i32_0 = arith.constant 0 : i32
    %c0_i32_1 = arith.constant 0 : i32
    return %c0_i32, %c0_i32_0 : i32, i32
  }
  func.func @transform_4(%arg0: i32, %arg1: i32) -> (i32, i32, i32) {
    %c0_i32 = arith.constant 0 : i32
    %c0_i32_0 = arith.constant 0 : i32
    return %arg0, %arg1, %c0_i32 : i32, i32, i32
  }
}

module attributes {stable_mosaic.version = 11 : i64} {
  func.func @_masked_pool_kernel(%arg0: i32, %arg1: i32, %arg2: memref<1x4x256xf32, #tpu.memory_space<vmem>>, %arg3: memref<1x1x256xf32, #tpu.memory_space<vmem>>, %arg4: memref<256x16xf32, #tpu.memory_space<vmem>>, %arg5: memref<1x16xf32, #tpu.memory_space<vmem>>, %arg6: memref<1x4x16xf32, #tpu.memory_space<vmem>>) attributes {dimension_semantics = [#tpu.dimension_semantics<parallel>, #tpu.dimension_semantics<parallel>], iteration_bounds = array<i64: 2, 1>, scalar_prefetch = 0 : i64, scratch_operands = 0 : i64, tpu.core_type = #tpu.core_type<tc>, window_params = [{transform_indices = @transform_0, window_bounds = array<i64: 1, 4, 256>}, {transform_indices = @transform_1, window_bounds = array<i64: 1, 1, 256>}, {pipeline_mode = #tpu.pipeline_mode<synchronous>, transform_indices = @transform_2, window_bounds = array<i64: 256, 16>}, {pipeline_mode = #tpu.pipeline_mode<synchronous>, transform_indices = @transform_3, window_bounds = array<i64: 1, 16>}, {transform_indices = @transform_4, window_bounds = array<i64: 1, 4, 16>}]} {
    %c0 = arith.constant 0 : index
    %c0_0 = arith.constant 0 : index
    %c0_1 = arith.constant 0 : index
    %0 = vector.load %arg2[%c0, %c0_0, %c0_1] : memref<1x4x256xf32, #tpu.memory_space<vmem>>, vector<1x4x256xf32>
    %1 = vector.shape_cast %0 : vector<1x4x256xf32> to vector<4x256xf32>
    %c0_2 = arith.constant 0 : index
    %c0_3 = arith.constant 0 : index
    %c0_4 = arith.constant 0 : index
    %2 = vector.load %arg3[%c0_2, %c0_3, %c0_4] : memref<1x1x256xf32, #tpu.memory_space<vmem>>, vector<1x1x256xf32>
    %3 = vector.shape_cast %2 : vector<1x1x256xf32> to vector<1x256xf32>
    %4 = vector.broadcast %3 : vector<1x256xf32> to vector<4x256xf32>
    %5 = arith.mulf %1, %4 : vector<4x256xf32>
    %c0_5 = arith.constant 0 : index
    %c0_6 = arith.constant 0 : index
    %6 = vector.load %arg4[%c0_5, %c0_6] : memref<256x16xf32, #tpu.memory_space<vmem>>, vector<256x16xf32>
    %cst = arith.constant dense<0.000000e+00> : vector<4x16xf32>
    %7 = tpu.matmul %5, %6, %cst {dimension_numbers = #tpu.dot_dimension_numbers<[1], [0], [0], [1], [0, 0, 1, 1], [], []>} : vector<4x256xf32>, vector<256x16xf32>, vector<4x16xf32> -> vector<4x16xf32>
    %c0_7 = arith.constant 0 : index
    %c0_8 = arith.constant 0 : index
    %8 = vector.load %arg5[%c0_7, %c0_8] : memref<1x16xf32, #tpu.memory_space<vmem>>, vector<1x16xf32>
    %9 = vector.broadcast %8 : vector<1x16xf32> to vector<4x16xf32>
    %10 = arith.mulf %7, %9 : vector<4x16xf32>
    %c0_9 = arith.constant 0 : index
    %c0_10 = arith.constant 0 : index
    %c0_11 = arith.constant 0 : index
    %11 = vector.load %arg6[%c0_9, %c0_10, %c0_11] : memref<1x4x16xf32, #tpu.memory_space<vmem>>, vector<1x4x16xf32>
    %12 = vector.shape_cast %11 : vector<1x4x16xf32> to vector<4x16xf32>
    %13 = vector.shape_cast %10 : vector<4x16xf32> to vector<1x4x16xf32>
    tpu.vector_store %arg6[%c0_9, %c0_10, %c0_11], %13 {strides = array<i32>} : memref<1x4x16xf32, #tpu.memory_space<vmem>>, vector<1x4x16xf32>,
    return
  }
  func.func @transform_0(%arg0: i32, %arg1: i32) -> (i32, i32, i32) {
    %c0_i32 = arith.constant 0 : i32
    %c0_i32_0 = arith.constant 0 : i32
    return %arg0, %arg1, %c0_i32 : i32, i32, i32
  }
  func.func @transform_1(%arg0: i32, %arg1: i32) -> (i32, i32, i32) {
    %c0_i32 = arith.constant 0 : i32
    %c0_i32_0 = arith.constant 0 : i32
    %c0_i32_1 = arith.constant 0 : i32
    return %arg0, %c0_i32, %c0_i32_0 : i32, i32, i32
  }
  func.func @transform_2(%arg0: i32, %arg1: i32) -> (i32, i32) {
    %c0_i32 = arith.constant 0 : i32
    %c0_i32_0 = arith.constant 0 : i32
    %c0_i32_1 = arith.constant 0 : i32
    return %c0_i32, %c0_i32_0 : i32, i32
  }
  func.func @transform_3(%arg0: i32, %arg1: i32) -> (i32, i32) {
    %c0_i32 = arith.constant 0 : i32
    %c0_i32_0 = arith.constant 0 : i32
    %c0_i32_1 = arith.constant 0 : i32
    return %c0_i32, %c0_i32_0 : i32, i32
  }
  func.func @transform_4(%arg0: i32, %arg1: i32) -> (i32, i32, i32) {
    %c0_i32 = arith.constant 0 : i32
    %c0_i32_0 = arith.constant 0 : i32
    return %arg0, %arg1, %c0_i32 : i32, i32, i32
  }
}

</mosaic_0001>

<llo_original>
// kernel: tpu_custom_call.1
$region0: #{tpu_custom_call.1}
  #allocation0 [shape = 'u32[]', space=smem, size = 0x4, offset = 0x4, fixed_abs, tag = 'smem constant byte address 0x4 - core index']
  #allocation1 [shape = 'u32[144,128]{1,0:T(1,128)}', space=vmem, size = 0x12000, scoped, tag = 'internal scratch']
  %s0 = inlined_call_operand.vmem [shape: f32[2,4,256], index: 0, kind: input, shape index: {}]
  %s1 = inlined_call_operand.vmem [shape: f32[2,1,256], index: 1, kind: input, shape index: {}]
  %s2 = inlined_call_operand.vmem [shape: f32[256,16], index: 2, kind: input, shape index: {}]
  %s3 = inlined_call_operand.vmem [shape: f32[1,16], index: 3, kind: input, shape index: {}]
  %s4 = inlined_call_operand.hbm [shape: f32[2,4,16], index: 4, kind: output, shape index: {}]
  %s5 = sld [smem:[#allocation0]]
  $region49: #{tpu_custom_call.1} parent=0
    _
  %s7 = ssub.s32 1, %s5
  %s8 = scalar_select 0, %s7, %s5
  $region1: #{tpu_custom_call.1} parent=0
    #allocation2 [shape = 'u8[4096]{0}', space=vmem, size = 0x1000, scoped, tag = 'output window, operand 0']
    #allocation3 [shape = 's32[2]{0}', space=sflag, size = 0x8, scoped, tag = 'scoped memory for tpu_custom_call.1']
    %9 = vsyncpa [#allocation3], 0
    %s10 = scalar_lea.sflag [#allocation3], 1
    %11 = vsyncpa %s10, 0
    loop: start=0, step=1, limit=4
    $region2: #{tpu_custom_call.1} parent=1 // loop_pre_header
      _
    $region3: #{tpu_custom_call.1} parent=1 // loop_header
      %s13 = sphi 0, %s17
      %p14 = scmp.ge.s32.totalorder %s13, 4
      %s20 = sphi 0, %s32
      %s21 = sphi 0, %s28
      %s22 = sphi 0, %s20
      %s23 = sphi 0, %s21
      %s24 = sphi 0, %s22
      %s25 = sphi 0, %s23
      %s37 = sphi 0, %s39
      %s40 = sphi 0, %s37
      %s41 = sphi 0, %s40
      %s57 = sphi 0, %s41
      %s63 = sphi 0, %s65
      %s66 = sphi 0, %s63
      %s67 = sphi 0, %s66
      %s83 = sphi 0, %s67
      %s87 = sphi 0, %s87
      %s89 = sphi 0, %s87
      %s90 = sphi 0, %s89
      %s104 = sphi 0, %s90
      %s108 = sphi 0, %s108
      %s110 = sphi 0, %s108
      %s111 = sphi 0, %s110
      %s125 = sphi 0, %s111
      %s133 = sphi 0, %s135
      %s136 = sphi 0, %s133
      %s137 = sphi 0, %s136
      %s153 = sphi 0, %s137
    $region4: #{tpu_custom_call.1} parent=1 // loop_header_branch
      %16 = sbr.rel (%p14) target = $region8
    $region5: #{tpu_custom_call.1} parent=1 // loop_body
      %s18 = ssub.s32 %s13, 1
      %s19 = ssub.s32 %s13, 2
      %s26 = sadd.s32 1, %s21
      %p27 = scmp.ge.s32.totalorder %s26, 1
      %s28 = scalar_select %p27, 0, %s26
      %s29 = sadd.s32 1, %s20
      %s30 = scalar_select %p27, %s29, %s20
      %p31 = scmp.ge.s32.totalorder %s30, 2
      %s32 = scalar_select %p31, 0, %s30
      %s33 = ssub.s32 %s20, %s32
      %s34 = ssub.s32 %s21, %s28
      %s35 = sor.u32 %s33, %s34
      %p36 = scmp.eq.s32.totalorder %s35, 0
      %s38 = sadd.s32 %s37, 1
      %s39 = scalar_select %p36, %s37, %s38
      %p42 = pneg %p36
      %p43 = scmp.eq.s32.totalorder %s13, 1
      %p44 = por %p42, %p43
      %p45 = scmp.ne.s32.totalorder %s37, %s40
      %p46 = scmp.eq.s32.totalorder %s13, 0
      %p47 = por %p45, %p46
      %p48 = scmp.ne.s32.totalorder %s37, %s40
      %p49 = scmp.eq.s32.totalorder %s18, 1
      %p50 = por %p48, %p49
      %p51 = scmp.ne.s32.totalorder %s40, %s41
      %p52 = scmp.eq.s32.totalorder %s18, 0
      %p53 = por %p51, %p52
      %p54 = scmp.ne.s32.totalorder %s40, %s41
      %p55 = scmp.eq.s32.totalorder %s19, 1
      %p56 = por %p54, %p55
      %p58 = scmp.ne.s32.totalorder %s41, %s57
      %p59 = scmp.eq.s32.totalorder %s19, 0
      %p60 = por %p58, %p59
      %s61 = ssub.s32 %s20, %s32
      %p62 = scmp.eq.s32.totalorder %s61, 0
      %s64 = sadd.s32 %s63, 1
      %s65 = scalar_select %p62, %s63, %s64
      %p68 = pneg %p62
      %p69 = scmp.eq.s32.totalorder %s13, 1
      %p70 = por %p68, %p69
      %p71 = scmp.ne.s32.totalorder %s63, %s66
      %p72 = scmp.eq.s32.totalorder %s13, 0
      %p73 = por %p71, %p72
      %p74 = scmp.ne.s32.totalorder %s63, %s66
      %p75 = scmp.eq.s32.totalorder %s18, 1
      %p76 = por %p74, %p75
      %p77 = scmp.ne.s32.totalorder %s66, %s67
      %p78 = scmp.eq.s32.totalorder %s18, 0
      %p79 = por %p77, %p78
      %p80 = scmp.ne.s32.totalorder %s66, %s67
      %p81 = scmp.eq.s32.totalorder %s19, 1
      %p82 = por %p80, %p81
      %p84 = scmp.ne.s32.totalorder %s67, %s83
      %p85 = scmp.eq.s32.totalorder %s19, 0
      %p86 = por %p84, %p85
      %s88 = sadd.s32 %s87, 1
      %p91 = scmp.eq.s32.totalorder %s13, 1
      %p92 = scmp.ne.s32.totalorder %s87, %s89
      %p93 = scmp.eq.s32.totalorder %s13, 0
      %p94 = por %p92, %p93
      %p95 = scmp.ne.s32.totalorder %s87, %s89
      %p96 = scmp.eq.s32.totalorder %s18, 1
      %p97 = por %p95, %p96
      %p98 = scmp.ne.s32.totalorder %s89, %s90
      %p99 = scmp.eq.s32.totalorder %s18, 0
      %p100 = por %p98, %p99
      %p101 = scmp.ne.s32.totalorder %s89, %s90
      %p102 = scmp.eq.s32.totalorder %s19, 1
      %p103 = por %p101, %p102
      %p105 = scmp.ne.s32.totalorder %s90, %s104
      %p106 = scmp.eq.s32.totalorder %s19, 0
      %p107 = por %p105, %p106
      %s109 = sadd.s32 %s108, 1
      %p112 = scmp.eq.s32.totalorder %s13, 1
      %p113 = scmp.ne.s32.totalorder %s108, %s110
      %p114 = scmp.eq.s32.totalorder %s13, 0
      %p115 = por %p113, %p114
      %p116 = scmp.ne.s32.totalorder %s108, %s110
      %p117 = scmp.eq.s32.totalorder %s18, 1
      %p118 = por %p116, %p117
      %p119 = scmp.ne.s32.totalorder %s110, %s111
      %p120 = scmp.eq.s32.totalorder %s18, 0
      %p121 = por %p119, %p120
      %p122 = scmp.ne.s32.totalorder %s110, %s111
      %p123 = scmp.eq.s32.totalorder %s19, 1
      %p124 = por %p122, %p123
      %p126 = scmp.ne.s32.totalorder %s111, %s125
      %p127 = scmp.eq.s32.totalorder %s19, 0
      %p128 = por %p126, %p127
      %s129 = ssub.s32 %s20, %s32
      %s130 = ssub.s32 %s21, %s28
      %s131 = sor.u32 %s129, %s130
      %p132 = scmp.eq.s32.totalorder %s131, 0
      %s134 = sadd.s32 %s133, 1
      %s135 = scalar_select %p132, %s133, %s134
      %p138 = pneg %p132
      %p139 = scmp.eq.s32.totalorder %s13, 1
      %p140 = por %p138, %p139
      %p141 = scmp.ne.s32.totalorder %s133, %s136
      %p142 = scmp.eq.s32.totalorder %s13, 0
      %p143 = por %p141, %p142
      %p144 = scmp.ne.s32.totalorder %s133, %s136
      %p145 = scmp.eq.s32.totalorder %s18, 1
      %p146 = por %p144, %p145
      %p147 = scmp.ne.s32.totalorder %s136, %s137
      %p148 = scmp.eq.s32.totalorder %s18, 0
      %p149 = por %p147, %p148
      %p150 = scmp.ne.s32.totalorder %s136, %s137
      %p151 = scmp.eq.s32.totalorder %s19, 1
      %p152 = por %p150, %p151
      %p154 = scmp.ne.s32.totalorder %s137, %s153
      %p155 = scmp.eq.s32.totalorder %s19, 0
      %p156 = por %p154, %p155
      %p157 = scmp.le.s32.totalorder 1, %s13
      %p158 = scmp.lt.s32.totalorder %s13, 3
      %p159 = pnand %p157, %p158
      %p160 = pneg %p159
      // Predicated region
      $region9: #{tpu_custom_call.1} parent=5 // pred_check
        _
      $region10: #{tpu_custom_call.1} parent=5 // pred_check_branch
        %162 = sbr.rel (%p159) target = $region12
      $region11: #{tpu_custom_call.1} parent=5 // pred_region
        %s163 = ssub.s32 %s13, 1
        // Predicated region
        $region13: #{tpu_custom_call.1} parent=11 // pred_check
          %p164 = pneg %p100
        $region14: #{tpu_custom_call.1} parent=11 // pred_check_branch
          %166 = sbr.rel (%p164) target = $region16
        $region15: #{tpu_custom_call.1} parent=11 // pred_region
          _
        $region16: #{tpu_custom_call.1} parent=11 // pred_fallthru
          _
        // Predicated region
        $region17: #{tpu_custom_call.1} parent=11 // pred_check
          %p167 = pneg %p121
        $region18: #{tpu_custom_call.1} parent=11 // pred_check_branch
          %169 = sbr.rel (%p167) target = $region20
        $region19: #{tpu_custom_call.1} parent=11 // pred_region
          _
        $region20: #{tpu_custom_call.1} parent=11 // pred_fallthru
          _
      $region12: #{tpu_custom_call.1} parent=5 // pred_fallthru
        _
      %p170 = scmp.lt.s32.totalorder %s13, 2
      // Predicated region
      $region21: #{tpu_custom_call.1} parent=5 // pred_check
        %p171 = pneg %p170
      $region22: #{tpu_custom_call.1} parent=5 // pred_check_branch
        %173 = sbr.rel (%p171) target = $region24
      $region23: #{tpu_custom_call.1} parent=5 // pred_region
        // Predicated region
        $region25: #{tpu_custom_call.1} parent=23 // pred_check
          %p174 = pneg %p47
        $region26: #{tpu_custom_call.1} parent=23 // pred_check_branch
          %176 = sbr.rel (%p174) target = $region28
        $region27: #{tpu_custom_call.1} parent=23 // pred_region
          %p177 = scmp.lt.s32.totalorder %s20, 1
          %s178 = scalar_select %p177, %s20, 1
          %p179 = scmp.lt.s32.totalorder %s21, 0
          %s180 = scalar_select %p179, %s21, 0
          %s181 = smul.addr %s180, 2
          %s182 = smul.addr %s178, 2
          %s183 = sadd.s32 %s181, %s182
          %s184 = smul.addr %s183, 4
          %s185 = scalar_lea.vmem %s0, %s184
        $region28: #{tpu_custom_call.1} parent=23 // pred_fallthru
          _
        // Predicated region
        $region29: #{tpu_custom_call.1} parent=23 // pred_check
          %p186 = pneg %p73
        $region30: #{tpu_custom_call.1} parent=23 // pred_check_branch
          %188 = sbr.rel (%p186) target = $region32
        $region31: #{tpu_custom_call.1} parent=23 // pred_region
          %p189 = scmp.lt.s32.totalorder %s20, 1
          %s190 = scalar_select %p189, %s20, 1
          %s191 = smul.addr %s190, 2
          %s192 = scalar_lea.vmem %s1, %s191
        $region32: #{tpu_custom_call.1} parent=23 // pred_fallthru
          _
      $region24: #{tpu_custom_call.1} parent=5 // pred_fallthru
        _
      %p193 = scmp.le.s32.totalorder 1, %s13
      %p194 = scmp.lt.s32.totalorder %s13, 3
      %p195 = pnand %p193, %p194
      %p196 = pneg %p195
      // Predicated region
      $region33: #{tpu_custom_call.1} parent=5 // pred_check
        _
      $region34: #{tpu_custom_call.1} parent=5 // pred_check_branch
        %198 = sbr.rel (%p195) target = $region36
      $region35: #{tpu_custom_call.1} parent=5 // pred_region
        %s199 = ssub.s32 %s13, 1
        %p200 = scmp.lt.s32.totalorder %s22, 1
        %s201 = scalar_select %p200, %s22, 1
        %p202 = scmp.lt.s32.totalorder %s23, 0
        %s203 = scalar_select %p202, %s23, 0
        %s204 = smul.addr %s203, 2
        %s205 = smul.addr %s201, 2
        %s206 = sadd.s32 %s204, %s205
        %s207 = smul.addr %s206, 4
        %s208 = scalar_lea.vmem %s0, %s207
        %p209 = pneg %p53
        %p210 = pneg %p50
        %p211 = scmp.lt.s32.totalorder %s22, 1
        %s212 = scalar_select %p211, %s22, 1
        %s213 = smul.addr %s212, 2
        %s214 = scalar_lea.vmem %s1, %s213
        %p215 = pneg %p79
        %p216 = pneg %p76
        %p217 = pneg %p100
        %p218 = pneg %p97
        %p219 = pneg %p121
        %p220 = pneg %p118
        %p221 = pneg %p149
        %p222 = pneg %p146
        %s223 = sand.u32 %s136, 1
        %s224 = scalar_lea.sflag [#allocation3], %s223
        %s225 = sand.u32 %s136, 1
        %s226 = smul.addr %s225, 4
        %s227 = scalar_lea.vmem [#allocation2], %s226
        %p228 = scmp.lt.s32.totalorder %s22, 1
        %s229 = scalar_select %p228, %s22, 1
        %p230 = scmp.lt.s32.totalorder %s23, 0
        %s231 = scalar_select %p230, %s23, 0
        %s232 = smul.addr %s231, 2
        %s233 = smul.addr %s229, 2
        %s234 = sadd.s32 %s232, %s233
        %s235 = smul.addr %s234, 4
        %s236 = scalar_lea.vmem %s0, %s235
        %p237 = scmp.lt.s32.totalorder %s22, 1
        %s238 = scalar_select %p237, %s22, 1
        %s239 = smul.addr %s238, 2
        %s240 = scalar_lea.vmem %s1, %s239
        %v241 = vld [vmem:[%s236] sm:$0xff]
        %v242 = vld [vmem:[%s240] sm:$0x3]
        %v244 = vlaneseq
        %v245 = vshrl.u32 %v244, 7
        %v246 = vsub.s32 0, %v245
        %v247 = vrot.slane %v242, %v246
        %v248 = vlaneseq
        %v249 = vshrl.u32 %v248, 7
        %v250 = vsub.s32 1, %v249
        %v251 = vrot.slane %v242, %v250
        %v252 = vcombine.low %v247, %v251
        %v254 = vmul.f32 %v241, %v252
        %v255 = vld [vmem:[%s2] sm:$0xff]
        %v256 = vld [vmem:[%s2 + $0x8] sm:$0xff]
        %v257 = vld [vmem:[%s2 + $0x10] sm:$0xff]
        %v258 = vld [vmem:[%s2 + $0x18] sm:$0xff]
        %v259 = vld [vmem:[%s2 + $0x20] sm:$0xff]
        %v260 = vld [vmem:[%s2 + $0x28] sm:$0xff]
        %v261 = vld [vmem:[%s2 + $0x30] sm:$0xff]
        %v262 = vld [vmem:[%s2 + $0x38] sm:$0xff]
        %v263 = vld [vmem:[%s2 + $0x40] sm:$0xff]
        %v264 = vld [vmem:[%s2 + $0x48] sm:$0xff]
        %v265 = vld [vmem:[%s2 + $0x50] sm:$0xff]
        %v266 = vld [vmem:[%s2 + $0x58] sm:$0xff]
        %v267 = vld [vmem:[%s2 + $0x60] sm:$0xff]
        %v268 = vld [vmem:[%s2 + $0x68] sm:$0xff]
        %v269 = vld [vmem:[%s2 + $0x70] sm:$0xff]
        %v270 = vld [vmem:[%s2 + $0x78] sm:$0xff]
        %v271 = vld [vmem:[%s2 + $0x80] sm:$0xff]
        %v272 = vld [vmem:[%s2 + $0x88] sm:$0xff]
        %v273 = vld [vmem:[%s2 + $0x90] sm:$0xff]
        %v274 = vld [vmem:[%s2 + $0x98] sm:$0xff]
        %v275 = vld [vmem:[%s2 + $0xa0] sm:$0xff]
        %v276 = vld [vmem:[%s2 + $0xa8] sm:$0xff]
        %v277 = vld [vmem:[%s2 + $0xb0] sm:$0xff]
        %v278 = vld [vmem:[%s2 + $0xb8] sm:$0xff]
        %v279 = vld [vmem:[%s2 + $0xc0] sm:$0xff]
        %v280 = vld [vmem:[%s2 + $0xc8] sm:$0xff]
        %v281 = vld [vmem:[%s2 + $0xd0] sm:$0xff]
        %v282 = vld [vmem:[%s2 + $0xd8] sm:$0xff]
        %v283 = vld [vmem:[%s2 + $0xe0] sm:$0xff]
        %v284 = vld [vmem:[%s2 + $0xe8] sm:$0xff]
        %v285 = vld [vmem:[%s2 + $0xf0] sm:$0xff]
        %v286 = vld [vmem:[%s2 + $0xf8] sm:$0xff]
        %v288 = vcombine.high %v254, %v254
        %290 = vmatprep.subr.mxu0 0.0
        %291 = vmatpush1.msra.mxu0 %v255
        %292 = vmatprep.subr.mxu0 0.0
        %293 = vmatpush1.msra.mxu0 %v256
        %294 = vmatprep.subr.mxu0 0.0
        %295 = vmatpush1.msra.mxu0 %v257
        %296 = vmatprep.subr.mxu0 0.0
        %297 = vmatpush1.msra.mxu0 %v258
        %298 = vmatprep.subr.mxu0 0.0
        %299 = vmatpush1.msra.mxu0 %v259
        %300 = vmatprep.subr.mxu0 0.0
        %301 = vmatpush1.msra.mxu0 %v260
        %302 = vmatprep.subr.mxu0 0.0
        %303 = vmatpush1.msra.mxu0 %v261
        %304 = vmatprep.subr.mxu0 0.0
        %305 = vmatpush1.msra.mxu0 %v262
        %306 = vmatprep.subr.mxu0 0.0
        %307 = vmatpush1.msra.mxu0 %v263
        %308 = vmatprep.subr.mxu0 0.0
        %309 = vmatpush1.msra.mxu0 %v264
        %310 = vmatprep.subr.mxu0 0.0
        %311 = vmatpush1.msra.mxu0 %v265
        %312 = vmatprep.subr.mxu0 0.0
        %313 = vmatpush1.msra.mxu0 %v266
        %314 = vmatprep.subr.mxu0 0.0
        %315 = vmatpush1.msra.mxu0 %v267
        %316 = vmatprep.subr.mxu0 0.0
        %317 = vmatpush1.msra.mxu0 %v268
        %318 = vmatprep.subr.mxu0 0.0
        %319 = vmatpush1.msra.mxu0 %v269
        %320 = vmatprep.subr.mxu0 0.0
        %321 = vmatpush1.msra.mxu0 %v270
        %322 = vmatprep.subr.mxu0 0.0
        %323 = vmatpush1.msra.mxu0 %v271
        %324 = vmatprep.subr.mxu0 0.0
        %325 = vmatpush1.msra.mxu0 %v272
        %326 = vmatprep.subr.mxu0 0.0
        %327 = vmatpush1.msra.mxu0 %v273
        %328 = vmatprep.subr.mxu0 0.0
        %329 = vmatpush1.msra.mxu0 %v274
        %330 = vmatprep.subr.mxu0 0.0
        %331 = vmatpush1.msra.mxu0 %v275
        %332 = vmatprep.subr.mxu0 0.0
        %333 = vmatpush1.msra.mxu0 %v276
        %334 = vmatprep.subr.mxu0 0.0
        %335 = vmatpush1.msra.mxu0 %v277
        %336 = vmatprep.subr.mxu0 0.0
        %337 = vmatpush1.msra.mxu0 %v278
        %338 = vmatprep.subr.mxu0 0.0
        %339 = vmatpush1.msra.mxu0 %v279
        %340 = vmatprep.subr.mxu0 0.0
        %341 = vmatpush1.msra.mxu0 %v280
        %342 = vmatprep.subr.mxu0 0.0
        %343 = vmatpush1.msra.mxu0 %v281
        %344 = vmatprep.subr.mxu0 0.0
        %345 = vmatpush1.msra.mxu0 %v282
        %346 = vmatprep.subr.mxu0 0.0
        %347 = vmatpush1.msra.mxu0 %v283
        %348 = vmatprep.subr.mxu0 0.0
        %349 = vmatpush1.msra.mxu0 %v284
        %350 = vmatprep.subr.mxu0 0.0
        %351 = vmatpush1.msra.mxu0 %v285
        %352 = vmatprep.subr.mxu0 0.0
        %353 = vmatpush1.msra.mxu0 %v286
        %354 = vmatprep.mubr.f32.mxu0 %v288
        %355 = vmatmul.mubr.f32.gmra.mrb[0].mxu0 %v254
        %v356 = vpop.f32.mrb[0].mxu0
        %v357 = vadd.f32 0.0, %v356
        %v358 = vpop.f32.mrb[0].mxu0
        %359 = vdwg.mxu0
        %v360 = vld [vmem:[%s3] sm:$0x1]
        %v362 = vlaneseq
        %v363 = vshrl.u32 %v362, 7
        %v364 = vsub.s32 0, %v363
        %v365 = vrot.slane %v360, %v364
        %v367 = vmul.f32 %v357, %v365
        %vm368 = vcmask 125952
        %369 = vst.msk [vmem:[%s227] sm:$0xf] %vm368, %v367
        %s370 = sand.u32 %s136, 1
        %s371 = scalar_lea.sflag [#allocation3], %s370
        %s372 = sand.u32 %s136, 1
        %s373 = smul.addr %s372, 4
        %s374 = scalar_lea.vmem [#allocation2], %s373
        // Predicated region
        $region37: #{tpu_custom_call.1} parent=35 // pred_check
          %p375 = pneg %p146
        $region38: #{tpu_custom_call.1} parent=35 // pred_check_branch
          %377 = sbr.rel (%p375) target = $region40
        $region39: #{tpu_custom_call.1} parent=35 // pred_region
          %s379 = ssub.s32 64, 64
          %380 = vsyncadd %s371, %s379
          %s381 = sadd.s32 %s23, %s22
          %s382 = smul.addr %s381, 64
          %s383 = scalar_lea.hbm %s4, %s382
          %s385 = sshll.u32 %s374, 4
          %s386 = int_to_ptr.vmem [resolvable:$true] %s385
          %388 = dma.vmem_to_hbm [thread:$0]  %s386, 64, %s383, %s371
        $region40: #{tpu_custom_call.1} parent=35 // pred_fallthru
          _
      $region36: #{tpu_custom_call.1} parent=5 // pred_fallthru
        _
      %p389 = scmp.le.s32.totalorder 2, %s13
      // Predicated region
      $region41: #{tpu_custom_call.1} parent=5 // pred_check
        %p390 = pneg %p389
      $region42: #{tpu_custom_call.1} parent=5 // pred_check_branch
        %392 = sbr.rel (%p390) target = $region44
      $region43: #{tpu_custom_call.1} parent=5 // pred_region
        %s393 = ssub.s32 %s13, 2
        // Predicated region
        $region45: #{tpu_custom_call.1} parent=43 // pred_check
          %p394 = pneg %p152
        $region46: #{tpu_custom_call.1} parent=43 // pred_check_branch
          %396 = sbr.rel (%p394) target = $region48
        $region47: #{tpu_custom_call.1} parent=43 // pred_region
          %s397 = sand.u32 %s137, 1
          %s398 = scalar_lea.sflag [#allocation3], %s397
          %s399 = sand.u32 %s137, 1
          %s400 = smul.addr %s399, 4
          %s401 = scalar_lea.vmem [#allocation2], %s400
          %402 = dma.done %s398, 64
        $region48: #{tpu_custom_call.1} parent=43 // pred_fallthru
          _
      $region44: #{tpu_custom_call.1} parent=5 // pred_fallthru
        _
    $region6: #{tpu_custom_call.1} parent=1 // loop_footer
      %s17 = sadd.s32 1, %s13
    $region7: #{tpu_custom_call.1} parent=1 // loop_footer_branch
      %12 = sbr.rel target = $region3
    $region8: #{tpu_custom_call.1} parent=1 // loop_exit
      _
    %403 = vsyncpa [#allocation3], 1
    %s404 = scalar_lea.sflag [#allocation3], 1
    %405 = vsyncpa %s404, 1

// kernel: tpu_custom_call.1
$region0: #{tpu_custom_call.1}
  #allocation0 [shape = 'u32[]', space=smem, size = 0x4, offset = 0x4, fixed_abs, tag = 'smem constant byte address 0x4 - core index']
  #allocation1 [shape = 'u32[144,128]{1,0:T(1,128)}', space=vmem, size = 0x12000, scoped, tag = 'internal scratch']
  %s0 = inlined_call_operand.vmem [shape: f32[2,4,256], index: 0, kind: input, shape index: {}]
  %s1 = inlined_call_operand.vmem [shape: f32[2,1,256], index: 1, kind: input, shape index: {}]
  %s2 = inlined_call_operand.vmem [shape: f32[256,16], index: 2, kind: input, shape index: {}]
  %s3 = inlined_call_operand.vmem [shape: f32[1,16], index: 3, kind: input, shape index: {}]
  %s4 = inlined_call_operand.hbm [shape: f32[2,4,16], index: 4, kind: output, shape index: {}]
  %s5 = sld [smem:[#allocation0]]
  $region49: #{tpu_custom_call.1} parent=0
    _
  %s7 = ssub.s32 1, %s5
  %s8 = scalar_select 0, %s7, %s5
  $region1: #{tpu_custom_call.1} parent=0
    #allocation2 [shape = 'u8[4096]{0}', space=vmem, size = 0x1000, scoped, tag = 'output window, operand 0']
    #allocation3 [shape = 's32[2]{0}', space=sflag, size = 0x8, scoped, tag = 'scoped memory for tpu_custom_call.1']
    %9 = vsyncpa [#allocation3], 0
    %s10 = scalar_lea.sflag [#allocation3], 1
    %11 = vsyncpa %s10, 0
    loop: start=0, step=1, limit=4
    $region2: #{tpu_custom_call.1} parent=1 // loop_pre_header
      _
    $region3: #{tpu_custom_call.1} parent=1 // loop_header
      %s13 = sphi 0, %s17
      %p14 = scmp.ge.s32.totalorder %s13, 4
      %s20 = sphi 0, %s32
      %s21 = sphi 0, %s28
      %s22 = sphi 0, %s20
      %s23 = sphi 0, %s21
      %s24 = sphi 0, %s22
      %s25 = sphi 0, %s23
      %s37 = sphi 0, %s39
      %s40 = sphi 0, %s37
      %s41 = sphi 0, %s40
      %s57 = sphi 0, %s41
      %s63 = sphi 0, %s65
      %s66 = sphi 0, %s63
      %s67 = sphi 0, %s66
      %s83 = sphi 0, %s67
      %s87 = sphi 0, %s87
      %s89 = sphi 0, %s87
      %s90 = sphi 0, %s89
      %s104 = sphi 0, %s90
      %s108 = sphi 0, %s108
      %s110 = sphi 0, %s108
      %s111 = sphi 0, %s110
      %s125 = sphi 0, %s111
      %s133 = sphi 0, %s135
      %s136 = sphi 0, %s133
      %s137 = sphi 0, %s136
      %s153 = sphi 0, %s137
    $region4: #{tpu_custom_call.1} parent=1 // loop_header_branch
      %16 = sbr.rel (%p14) target = $region8
    $region5: #{tpu_custom_call.1} parent=1 // loop_body
      %s18 = ssub.s32 %s13, 1
      %s19 = ssub.s32 %s13, 2
      %s26 = sadd.s32 1, %s21
      %p27 = scmp.ge.s32.totalorder %s26, 1
      %s28 = scalar_select %p27, 0, %s26
      %s29 = sadd.s32 1, %s20
      %s30 = scalar_select %p27, %s29, %s20
      %p31 = scmp.ge.s32.totalorder %s30, 2
      %s32 = scalar_select %p31, 0, %s30
      %s33 = ssub.s32 %s20, %s32
      %s34 = ssub.s32 %s21, %s28
      %s35 = sor.u32 %s33, %s34
      %p36 = scmp.eq.s32.totalorder %s35, 0
      %s38 = sadd.s32 %s37, 1
      %s39 = scalar_select %p36, %s37, %s38
      %p42 = pneg %p36
      %p43 = scmp.eq.s32.totalorder %s13, 1
      %p44 = por %p42, %p43
      %p45 = scmp.ne.s32.totalorder %s37, %s40
      %p46 = scmp.eq.s32.totalorder %s13, 0
      %p47 = por %p45, %p46
      %p48 = scmp.ne.s32.totalorder %s37, %s40
      %p49 = scmp.eq.s32.totalorder %s18, 1
      %p50 = por %p48, %p49
      %p51 = scmp.ne.s32.totalorder %s40, %s41
      %p52 = scmp.eq.s32.totalorder %s18, 0
      %p53 = por %p51, %p52
      %p54 = scmp.ne.s32.totalorder %s40, %s41
      %p55 = scmp.eq.s32.totalorder %s19, 1
      %p56 = por %p54, %p55
      %p58 = scmp.ne.s32.totalorder %s41, %s57
      %p59 = scmp.eq.s32.totalorder %s19, 0
      %p60 = por %p58, %p59
      %s61 = ssub.s32 %s20, %s32
      %p62 = scmp.eq.s32.totalorder %s61, 0
      %s64 = sadd.s32 %s63, 1
      %s65 = scalar_select %p62, %s63, %s64
      %p68 = pneg %p62
      %p69 = scmp.eq.s32.totalorder %s13, 1
      %p70 = por %p68, %p69
      %p71 = scmp.ne.s32.totalorder %s63, %s66
      %p72 = scmp.eq.s32.totalorder %s13, 0
      %p73 = por %p71, %p72
      %p74 = scmp.ne.s32.totalorder %s63, %s66
      %p75 = scmp.eq.s32.totalorder %s18, 1
      %p76 = por %p74, %p75
      %p77 = scmp.ne.s32.totalorder %s66, %s67
      %p78 = scmp.eq.s32.totalorder %s18, 0
      %p79 = por %p77, %p78
      %p80 = scmp.ne.s32.totalorder %s66, %s67
      %p81 = scmp.eq.s32.totalorder %s19, 1
      %p82 = por %p80, %p81
      %p84 = scmp.ne.s32.totalorder %s67, %s83
      %p85 = scmp.eq.s32.totalorder %s19, 0
      %p86 = por %p84, %p85
      %s88 = sadd.s32 %s87, 1
      %p91 = scmp.eq.s32.totalorder %s13, 1
      %p92 = scmp.ne.s32.totalorder %s87, %s89
      %p93 = scmp.eq.s32.totalorder %s13, 0
      %p94 = por %p92, %p93
      %p95 = scmp.ne.s32.totalorder %s87, %s89
      %p96 = scmp.eq.s32.totalorder %s18, 1
      %p97 = por %p95, %p96
      %p98 = scmp.ne.s32.totalorder %s89, %s90
      %p99 = scmp.eq.s32.totalorder %s18, 0
      %p100 = por %p98, %p99
      %p101 = scmp.ne.s32.totalorder %s89, %s90
      %p102 = scmp.eq.s32.totalorder %s19, 1
      %p103 = por %p101, %p102
      %p105 = scmp.ne.s32.totalorder %s90, %s104
      %p106 = scmp.eq.s32.totalorder %s19, 0
      %p107 = por %p105, %p106
      %s109 = sadd.s32 %s108, 1
      %p112 = scmp.eq.s32.totalorder %s13, 1
      %p113 = scmp.ne.s32.totalorder %s108, %s110
      %p114 = scmp.eq.s32.totalorder %s13, 0
      %p115 = por %p113, %p114
      %p116 = scmp.ne.s32.totalorder %s108, %s110
      %p117 = scmp.eq.s32.totalorder %s18, 1
      %p118 = por %p116, %p117
      %p119 = scmp.ne.s32.totalorder %s110, %s111
      %p120 = scmp.eq.s32.totalorder %s18, 0
      %p121 = por %p119, %p120
      %p122 = scmp.ne.s32.totalorder %s110, %s111
      %p123 = scmp.eq.s32.totalorder %s19, 1
      %p124 = por %p122, %p123
      %p126 = scmp.ne.s32.totalorder %s111, %s125
      %p127 = scmp.eq.s32.totalorder %s19, 0
      %p128 = por %p126, %p127
      %s129 = ssub.s32 %s20, %s32
      %s130 = ssub.s32 %s21, %s28
      %s131 = sor.u32 %s129, %s130
      %p132 = scmp.eq.s32.totalorder %s131, 0
      %s134 = sadd.s32 %s133, 1
      %s135 = scalar_select %p132, %s133, %s134
      %p138 = pneg %p132
      %p139 = scmp.eq.s32.totalorder %s13, 1
      %p140 = por %p138, %p139
      %p141 = scmp.ne.s32.totalorder %s133, %s136
      %p142 = scmp.eq.s32.totalorder %s13, 0
      %p143 = por %p141, %p142
      %p144 = scmp.ne.s32.totalorder %s133, %s136
      %p145 = scmp.eq.s32.totalorder %s18, 1
      %p146 = por %p144, %p145
      %p147 = scmp.ne.s32.totalorder %s136, %s137
      %p148 = scmp.eq.s32.totalorder %s18, 0
      %p149 = por %p147, %p148
      %p150 = scmp.ne.s32.totalorder %s136, %s137
      %p151 = scmp.eq.s32.totalorder %s19, 1
      %p152 = por %p150, %p151
      %p154 = scmp.ne.s32.totalorder %s137, %s153
      %p155 = scmp.eq.s32.totalorder %s19, 0
      %p156 = por %p154, %p155
      %p157 = scmp.le.s32.totalorder 1, %s13
      %p158 = scmp.lt.s32.totalorder %s13, 3
      %p159 = pnand %p157, %p158
      %p160 = pneg %p159
      // Predicated region
      $region9: #{tpu_custom_call.1} parent=5 // pred_check
        _
      $region10: #{tpu_custom_call.1} parent=5 // pred_check_branch
        %162 = sbr.rel (%p159) target = $region12
      $region11: #{tpu_custom_call.1} parent=5 // pred_region
        %s163 = ssub.s32 %s13, 1
        // Predicated region
        $region13: #{tpu_custom_call.1} parent=11 // pred_check
          %p164 = pneg %p100
        $region14: #{tpu_custom_call.1} parent=11 // pred_check_branch
          %166 = sbr.rel (%p164) target = $region16
        $region15: #{tpu_custom_call.1} parent=11 // pred_region
          _
        $region16: #{tpu_custom_call.1} parent=11 // pred_fallthru
          _
        // Predicated region
        $region17: #{tpu_custom_call.1} parent=11 // pred_check
          %p167 = pneg %p121
        $region18: #{tpu_custom_call.1} parent=11 // pred_check_branch
          %169 = sbr.rel (%p167) target = $region20
        $region19: #{tpu_custom_call.1} parent=11 // pred_region
          _
        $region20: #{tpu_custom_call.1} parent=11 // pred_fallthru
          _
      $region12: #{tpu_custom_call.1} parent=5 // pred_fallthru
        _
      %p170 = scmp.lt.s32.totalorder %s13, 2
      // Predicated region
      $region21: #{tpu_custom_call.1} parent=5 // pred_check
        %p171 = pneg %p170
      $region22: #{tpu_custom_call.1} parent=5 // pred_check_branch
        %173 = sbr.rel (%p171) target = $region24
      $region23: #{tpu_custom_call.1} parent=5 // pred_region
        // Predicated region
        $region25: #{tpu_custom_call.1} parent=23 // pred_check
          %p174 = pneg %p47
        $region26: #{tpu_custom_call.1} parent=23 // pred_check_branch
          %176 = sbr.rel (%p174) target = $region28
        $region27: #{tpu_custom_call.1} parent=23 // pred_region
          %p177 = scmp.lt.s32.totalorder %s20, 1
          %s178 = scalar_select %p177, %s20, 1
          %p179 = scmp.lt.s32.totalorder %s21, 0
          %s180 = scalar_select %p179, %s21, 0
          %s181 = smul.addr %s180, 2
          %s182 = smul.addr %s178, 2
          %s183 = sadd.s32 %s181, %s182
          %s184 = smul.addr %s183, 4
          %s185 = scalar_lea.vmem %s0, %s184
        $region28: #{tpu_custom_call.1} parent=23 // pred_fallthru
          _
        // Predicated region
        $region29: #{tpu_custom_call.1} parent=23 // pred_check
          %p186 = pneg %p73
        $region30: #{tpu_custom_call.1} parent=23 // pred_check_branch
          %188 = sbr.rel (%p186) target = $region32
        $region31: #{tpu_custom_call.1} parent=23 // pred_region
          %p189 = scmp.lt.s32.totalorder %s20, 1
          %s190 = scalar_select %p189, %s20, 1
          %s191 = smul.addr %s190, 2
          %s192 = scalar_lea.vmem %s1, %s191
        $region32: #{tpu_custom_call.1} parent=23 // pred_fallthru
          _
      $region24: #{tpu_custom_call.1} parent=5 // pred_fallthru
        _
      %p193 = scmp.le.s32.totalorder 1, %s13
      %p194 = scmp.lt.s32.totalorder %s13, 3
      %p195 = pnand %p193, %p194
      %p196 = pneg %p195
      // Predicated region
      $region33: #{tpu_custom_call.1} parent=5 // pred_check
        _
      $region34: #{tpu_custom_call.1} parent=5 // pred_check_branch
        %198 = sbr.rel (%p195) target = $region36
      $region35: #{tpu_custom_call.1} parent=5 // pred_region
        %s199 = ssub.s32 %s13, 1
        %p200 = scmp.lt.s32.totalorder %s22, 1
        %s201 = scalar_select %p200, %s22, 1
        %p202 = scmp.lt.s32.totalorder %s23, 0
        %s203 = scalar_select %p202, %s23, 0
        %s204 = smul.addr %s203, 2
        %s205 = smul.addr %s201, 2
        %s206 = sadd.s32 %s204, %s205
        %s207 = smul.addr %s206, 4
        %s208 = scalar_lea.vmem %s0, %s207
        %p209 = pneg %p53
        %p210 = pneg %p50
        %p211 = scmp.lt.s32.totalorder %s22, 1
        %s212 = scalar_select %p211, %s22, 1
        %s213 = smul.addr %s212, 2
        %s214 = scalar_lea.vmem %s1, %s213
        %p215 = pneg %p79
        %p216 = pneg %p76
        %p217 = pneg %p100
        %p218 = pneg %p97
        %p219 = pneg %p121
        %p220 = pneg %p118
        %p221 = pneg %p149
        %p222 = pneg %p146
        %s223 = sand.u32 %s136, 1
        %s224 = scalar_lea.sflag [#allocation3], %s223
        %s225 = sand.u32 %s136, 1
        %s226 = smul.addr %s225, 4
        %s227 = scalar_lea.vmem [#allocation2], %s226
        %p228 = scmp.lt.s32.totalorder %s22, 1
        %s229 = scalar_select %p228, %s22, 1
        %p230 = scmp.lt.s32.totalorder %s23, 0
        %s231 = scalar_select %p230, %s23, 0
        %s232 = smul.addr %s231, 2
        %s233 = smul.addr %s229, 2
        %s234 = sadd.s32 %s232, %s233
        %s235 = smul.addr %s234, 4
        %s236 = scalar_lea.vmem %s0, %s235
        %p237 = scmp.lt.s32.totalorder %s22, 1
        %s238 = scalar_select %p237, %s22, 1
        %s239 = smul.addr %s238, 2
        %s240 = scalar_lea.vmem %s1, %s239
        %v241 = vld [vmem:[%s236] sm:$0xff]
        %v242 = vld [vmem:[%s240] sm:$0x3]
        %v244 = vlaneseq
        %v245 = vshrl.u32 %v244, 7
        %v246 = vsub.s32 0, %v245
        %v247 = vrot.slane %v242, %v246
        %v248 = vlaneseq
        %v249 = vshrl.u32 %v248, 7
        %v250 = vsub.s32 1, %v249
        %v251 = vrot.slane %v242, %v250
        %v252 = vcombine.low %v247, %v251
        %v254 = vmul.f32 %v241, %v252
        %v255 = vld [vmem:[%s2] sm:$0xff]
        %v256 = vld [vmem:[%s2 + $0x8] sm:$0xff]
        %v257 = vld [vmem:[%s2 + $0x10] sm:$0xff]
        %v258 = vld [vmem:[%s2 + $0x18] sm:$0xff]
        %v259 = vld [vmem:[%s2 + $0x20] sm:$0xff]
        %v260 = vld [vmem:[%s2 + $0x28] sm:$0xff]
        %v261 = vld [vmem:[%s2 + $0x30] sm:$0xff]
        %v262 = vld [vmem:[%s2 + $0x38] sm:$0xff]
        %v263 = vld [vmem:[%s2 + $0x40] sm:$0xff]
        %v264 = vld [vmem:[%s2 + $0x48] sm:$0xff]
        %v265 = vld [vmem:[%s2 + $0x50] sm:$0xff]
        %v266 = vld [vmem:[%s2 + $0x58] sm:$0xff]
        %v267 = vld [vmem:[%s2 + $0x60] sm:$0xff]
        %v268 = vld [vmem:[%s2 + $0x68] sm:$0xff]
        %v269 = vld [vmem:[%s2 + $0x70] sm:$0xff]
        %v270 = vld [vmem:[%s2 + $0x78] sm:$0xff]
        %v271 = vld [vmem:[%s2 + $0x80] sm:$0xff]
        %v272 = vld [vmem:[%s2 + $0x88] sm:$0xff]
        %v273 = vld [vmem:[%s2 + $0x90] sm:$0xff]
        %v274 = vld [vmem:[%s2 + $0x98] sm:$0xff]
        %v275 = vld [vmem:[%s2 + $0xa0] sm:$0xff]
        %v276 = vld [vmem:[%s2 + $0xa8] sm:$0xff]
        %v277 = vld [vmem:[%s2 + $0xb0] sm:$0xff]
        %v278 = vld [vmem:[%s2 + $0xb8] sm:$0xff]
        %v279 = vld [vmem:[%s2 + $0xc0] sm:$0xff]
        %v280 = vld [vmem:[%s2 + $0xc8] sm:$0xff]
        %v281 = vld [vmem:[%s2 + $0xd0] sm:$0xff]
        %v282 = vld [vmem:[%s2 + $0xd8] sm:$0xff]
        %v283 = vld [vmem:[%s2 + $0xe0] sm:$0xff]
        %v284 = vld [vmem:[%s2 + $0xe8] sm:$0xff]
        %v285 = vld [vmem:[%s2 + $0xf0] sm:$0xff]
        %v286 = vld [vmem:[%s2 + $0xf8] sm:$0xff]
        %v288 = vcombine.high %v254, %v254
        %290 = vmatprep.subr.mxu0 0.0
        %291 = vmatpush1.msra.mxu0 %v255
        %292 = vmatprep.subr.mxu0 0.0
        %293 = vmatpush1.msra.mxu0 %v256
        %294 = vmatprep.subr.mxu0 0.0
        %295 = vmatpush1.msra.mxu0 %v257
        %296 = vmatprep.subr.mxu0 0.0
        %297 = vmatpush1.msra.mxu0 %v258
        %298 = vmatprep.subr.mxu0 0.0
        %299 = vmatpush1.msra.mxu0 %v259
        %300 = vmatprep.subr.mxu0 0.0
        %301 = vmatpush1.msra.mxu0 %v260
        %302 = vmatprep.subr.mxu0 0.0
        %303 = vmatpush1.msra.mxu0 %v261
        %304 = vmatprep.subr.mxu0 0.0
        %305 = vmatpush1.msra.mxu0 %v262
        %306 = vmatprep.subr.mxu0 0.0
        %307 = vmatpush1.msra.mxu0 %v263
        %308 = vmatprep.subr.mxu0 0.0
        %309 = vmatpush1.msra.mxu0 %v264
        %310 = vmatprep.subr.mxu0 0.0
        %311 = vmatpush1.msra.mxu0 %v265
        %312 = vmatprep.subr.mxu0 0.0
        %313 = vmatpush1.msra.mxu0 %v266
        %314 = vmatprep.subr.mxu0 0.0
        %315 = vmatpush1.msra.mxu0 %v267
        %316 = vmatprep.subr.mxu0 0.0
        %317 = vmatpush1.msra.mxu0 %v268
        %318 = vmatprep.subr.mxu0 0.0
        %319 = vmatpush1.msra.mxu0 %v269
        %320 = vmatprep.subr.mxu0 0.0
        %321 = vmatpush1.msra.mxu0 %v270
        %322 = vmatprep.subr.mxu0 0.0
        %323 = vmatpush1.msra.mxu0 %v271
        %324 = vmatprep.subr.mxu0 0.0
        %325 = vmatpush1.msra.mxu0 %v272
        %326 = vmatprep.subr.mxu0 0.0
        %327 = vmatpush1.msra.mxu0 %v273
        %328 = vmatprep.subr.mxu0 0.0
        %329 = vmatpush1.msra.mxu0 %v274
        %330 = vmatprep.subr.mxu0 0.0
        %331 = vmatpush1.msra.mxu0 %v275
        %332 = vmatprep.subr.mxu0 0.0
        %333 = vmatpush1.msra.mxu0 %v276
        %334 = vmatprep.subr.mxu0 0.0
        %335 = vmatpush1.msra.mxu0 %v277
        %336 = vmatprep.subr.mxu0 0.0
        %337 = vmatpush1.msra.mxu0 %v278
        %338 = vmatprep.subr.mxu0 0.0
        %339 = vmatpush1.msra.mxu0 %v279
        %340 = vmatprep.subr.mxu0 0.0
        %341 = vmatpush1.msra.mxu0 %v280
        %342 = vmatprep.subr.mxu0 0.0
        %343 = vmatpush1.msra.mxu0 %v281
        %344 = vmatprep.subr.mxu0 0.0
        %345 = vmatpush1.msra.mxu0 %v282
        %346 = vmatprep.subr.mxu0 0.0
        %347 = vmatpush1.msra.mxu0 %v283
        %348 = vmatprep.subr.mxu0 0.0
        %349 = vmatpush1.msra.mxu0 %v284
        %350 = vmatprep.subr.mxu0 0.0
        %351 = vmatpush1.msra.mxu0 %v285
        %352 = vmatprep.subr.mxu0 0.0
        %353 = vmatpush1.msra.mxu0 %v286
        %354 = vmatprep.mubr.f32.mxu0 %v288
        %355 = vmatmul.mubr.f32.gmra.mrb[0].mxu0 %v254
        %v356 = vpop.f32.mrb[0].mxu0
        %v357 = vadd.f32 0.0, %v356
        %v358 = vpop.f32.mrb[0].mxu0
        %359 = vdwg.mxu0
        %v360 = vld [vmem:[%s3] sm:$0x1]
        %v362 = vlaneseq
        %v363 = vshrl.u32 %v362, 7
        %v364 = vsub.s32 0, %v363
        %v365 = vrot.slane %v360, %v364
        %v367 = vmul.f32 %v357, %v365
        %vm368 = vcmask 125952
        %369 = vst.msk [vmem:[%s227] sm:$0xf] %vm368, %v367
        %s370 = sand.u32 %s136, 1
        %s371 = scalar_lea.sflag [#allocation3], %s370
        %s372 = sand.u32 %s136, 1
        %s373 = smul.addr %s372, 4
        %s374 = scalar_lea.vmem [#allocation2], %s373
        // Predicated region
        $region37: #{tpu_custom_call.1} parent=35 // pred_check
          %p375 = pneg %p146
        $region38: #{tpu_custom_call.1} parent=35 // pred_check_branch
          %377 = sbr.rel (%p375) target = $region40
        $region39: #{tpu_custom_call.1} parent=35 // pred_region
          %s379 = ssub.s32 64, 64
          %380 = vsyncadd %s371, %s379
          %s381 = sadd.s32 %s23, %s22
          %s382 = smul.addr %s381, 64
          %s383 = scalar_lea.hbm %s4, %s382
          %s385 = sshll.u32 %s374, 4
          %s386 = int_to_ptr.vmem [resolvable:$true] %s385
          %388 = dma.vmem_to_hbm [thread:$0]  %s386, 64, %s383, %s371
        $region40: #{tpu_custom_call.1} parent=35 // pred_fallthru
          _
      $region36: #{tpu_custom_call.1} parent=5 // pred_fallthru
        _
      %p389 = scmp.le.s32.totalorder 2, %s13
      // Predicated region
      $region41: #{tpu_custom_call.1} parent=5 // pred_check
        %p390 = pneg %p389
      $region42: #{tpu_custom_call.1} parent=5 // pred_check_branch
        %392 = sbr.rel (%p390) target = $region44
      $region43: #{tpu_custom_call.1} parent=5 // pred_region
        %s393 = ssub.s32 %s13, 2
        // Predicated region
        $region45: #{tpu_custom_call.1} parent=43 // pred_check
          %p394 = pneg %p152
        $region46: #{tpu_custom_call.1} parent=43 // pred_check_branch
          %396 = sbr.rel (%p394) target = $region48
        $region47: #{tpu_custom_call.1} parent=43 // pred_region
          %s397 = sand.u32 %s137, 1
          %s398 = scalar_lea.sflag [#allocation3], %s397
          %s399 = sand.u32 %s137, 1
          %s400 = smul.addr %s399, 4
          %s401 = scalar_lea.vmem [#allocation2], %s400
          %402 = dma.done %s398, 64
        $region48: #{tpu_custom_call.1} parent=43 // pred_fallthru
          _
      $region44: #{tpu_custom_call.1} parent=5 // pred_fallthru
        _
    $region6: #{tpu_custom_call.1} parent=1 // loop_footer
      %s17 = sadd.s32 1, %s13
    $region7: #{tpu_custom_call.1} parent=1 // loop_footer_branch
      %12 = sbr.rel target = $region3
    $region8: #{tpu_custom_call.1} parent=1 // loop_exit
      _
    %403 = vsyncpa [#allocation3], 1
    %s404 = scalar_lea.sflag [#allocation3], 1
    %405 = vsyncpa %s404, 1

</llo_original>
